<compile_context>
chip_gen: v5e
topology: v5e:2x2
jax: 0.10.0
libtpu: 0.0.40
codegen_flags: <defaults>
</compile_context>

<pallas_src>
import jax
import jax.numpy as jnp
from jax.experimental import pallas as pl
from jax.experimental.pallas import tpu as pltpu

NUM_STEPS = 100
LAYER_SIZE = 10          # neuron-vector size (small, consistent with the module)

ALPHA = 0.2
THRESHOLD = -50.0
V_INIT = -70.0
V_RESET = -70.0

SUB = 8                  # sublane tile
LANES = 128              # lane tile


def compute_fractional_weights(num_steps: int, alpha: float) -> jnp.ndarray:
    """Deterministic parameter init mirroring FLIFNeuron.compute_weights()."""
    x = float(num_steps)
    nv = jnp.arange(num_steps - 1, dtype=jnp.float32)
    return (x + 1.0 - nv) ** (1.0 - alpha) - (x - nv) ** (1.0 - alpha)


def flif_step0_kernel(mem_ref, out_ref, mem_out_ref):
    """One FLIF neuron step at N == 0.

    mem_ref     : (8, 128)   neuron `memory` state (zeros at init), row 0 valid
    out_ref     : (24, 128)  packed [spike | V_new | delta_trace[:, 0]] tiles
    mem_out_ref : (8, 128)   updated memory (= V_new); aliased with mem_ref
    """
    # Single full-tile constant chain (computed once, no per-row loop).
    v_new = jnp.full((SUB, LANES), V_INIT, dtype=jnp.float32)
    spike = (v_new > THRESHOLD).astype(jnp.float32)
    v_new = jnp.where(spike > 0.0, jnp.float32(V_RESET), v_new)

    # update_memory: delta_trace[:, N-1] with N == 1  ->  column 0.
    delta = v_new - mem_ref[...]

    # Three unmasked full-(8,128) stores into the packed output.
    out_ref[0:SUB, :] = spike
    out_ref[SUB:2 * SUB, :] = v_new
    out_ref[2 * SUB:3 * SUB, :] = delta

    # memory = V_new  (written back through the aliased state buffer).
    mem_out_ref[...] = v_new


def flif_neuron_forward(I: jnp.ndarray, memory: jnp.ndarray):
    """I: (size,) injected current (unused at N==0); memory: (size,) state.

    Returns (spike, V_new, delta_trace_col0, memory_new), all (size,) f32.
    """
    del I  # dead on the N == 0 branch -> never DMA'd into the kernel
    size = memory.shape[0]

    mem_pad = (
        jnp.zeros((SUB, LANES), jnp.float32)
        .at[0, :size]
        .set(memory.astype(jnp.float32))
    )

    vmem_spec = pl.BlockSpec(memory_space=pltpu.MemorySpace.VMEM)

    out_packed, mem_new_pad = pl.pallas_call(
        flif_step0_kernel,
        in_specs=[vmem_spec],
        out_specs=(vmem_spec, vmem_spec),
        out_shape=(
            jax.ShapeDtypeStruct((3 * SUB, LANES), jnp.float32),  # spike|V|delta
            jax.ShapeDtypeStruct((SUB, LANES), jnp.float32),      # memory_new
        ),
        input_output_aliases={0: 1},  # memory state in == memory state out
    )(mem_pad)

    spike = out_packed[0, :size]
    v_new = out_packed[SUB, :size]
    delta = out_packed[2 * SUB, :size]
    memory_new = mem_new_pad[0, :size]
    return spike, v_new, delta, memory_new


if __name__ == "__main__":
    # Deterministic parameter init (shape (num_steps-1,), as in __init__).
    frac_weights = compute_fractional_weights(NUM_STEPS, ALPHA)
    assert frac_weights.shape == (NUM_STEPS - 1,)

    key = jax.random.PRNGKey(0)
    I = jax.random.normal(key, (LAYER_SIZE,), dtype=jnp.float32)  # ~ torch.randn
    memory0 = jnp.zeros((LAYER_SIZE,), jnp.float32)               # fresh neuron state

    spike, v_new, delta, memory_new = flif_neuron_forward(I, memory0)
    spike = jax.block_until_ready(spike)

    # Sanity checks against the exact PyTorch semantics of the first step:
    assert spike.shape == (LAYER_SIZE,) and spike.dtype == jnp.float32
    assert bool(jnp.all(spike == 0.0))            # V_init=-70 never crosses -50
    assert bool(jnp.all(v_new == V_INIT))         # membrane held at V_init
    assert bool(jnp.all(delta == V_INIT))         # delta_trace[:,0] = V_new - 0
    assert bool(jnp.all(memory_new == V_INIT))    # memory = V_new written back

    print("KERNEL_OK")
</pallas_src>

<mosaic_0001>
module attributes {stable_mosaic.version = 11 : i64} {
  func.func @flif_step0_kernel(%arg0: memref<8x128xf32, #tpu.memory_space<vmem>>, %arg1: memref<24x128xf32, #tpu.memory_space<vmem>>, %arg2: memref<8x128xf32, #tpu.memory_space<vmem>>) attributes {dimension_semantics = [], scalar_prefetch = 0 : i64, scratch_operands = 0 : i64, tpu.core_type = #tpu.core_type<tc>} {
    %cst = arith.constant -7.000000e+01 : f32
    %0 = vector.broadcast %cst : f32 to vector<8x128xf32>
    %cst_0 = arith.constant -5.000000e+01 : f32
    %1 = vector.broadcast %cst_0 : f32 to vector<8x128xf32>
    %2 = arith.cmpf ogt, %0, %1 : vector<8x128xf32>
    %3 = arith.extui %2 : vector<8x128xi1> to vector<8x128xi32>
    %4 = arith.sitofp %3 : vector<8x128xi32> to vector<8x128xf32>
    %cst_1 = arith.constant 0.000000e+00 : f32
    %5 = vector.broadcast %cst_1 : f32 to vector<8x128xf32>
    %6 = arith.cmpf ogt, %4, %5 : vector<8x128xf32>
    %cst_2 = arith.constant -7.000000e+01 : f32
    %7 = vector.broadcast %cst_2 : f32 to vector<8x128xf32>
    %8 = arith.select %6, %7, %0 : vector<8x128xi1>, vector<8x128xf32>
    %c0 = arith.constant 0 : index
    %c0_3 = arith.constant 0 : index
    %9 = vector.load %arg0[%c0, %c0_3] : memref<8x128xf32, #tpu.memory_space<vmem>>, vector<8x128xf32>
    %10 = arith.subf %8, %9 : vector<8x128xf32>
    %c0_4 = arith.constant 0 : index
    %c0_5 = arith.constant 0 : index
    %11 = vector.load %arg1[%c0_4, %c0_5] : memref<24x128xf32, #tpu.memory_space<vmem>>, vector<8x128xf32>
    tpu.vector_store %arg1[%c0_4, %c0_5], %4 {strides = array<i32>} : memref<24x128xf32, #tpu.memory_space<vmem>>, vector<8x128xf32>,
    %c8 = arith.constant 8 : index
    %c0_6 = arith.constant 0 : index
    %12 = vector.load %arg1[%c8, %c0_6] : memref<24x128xf32, #tpu.memory_space<vmem>>, vector<8x128xf32>
    tpu.vector_store %arg1[%c8, %c0_6], %8 {strides = array<i32>} : memref<24x128xf32, #tpu.memory_space<vmem>>, vector<8x128xf32>,
    %c16 = arith.constant 16 : index
    %c0_7 = arith.constant 0 : index
    %13 = vector.load %arg1[%c16, %c0_7] : memref<24x128xf32, #tpu.memory_space<vmem>>, vector<8x128xf32>
    tpu.vector_store %arg1[%c16, %c0_7], %10 {strides = array<i32>} : memref<24x128xf32, #tpu.memory_space<vmem>>, vector<8x128xf32>,
    %c0_8 = arith.constant 0 : index
    %c0_9 = arith.constant 0 : index
    %14 = vector.load %arg2[%c0_8, %c0_9] : memref<8x128xf32, #tpu.memory_space<vmem>>, vector<8x128xf32>
    tpu.vector_store %arg2[%c0_8, %c0_9], %8 {strides = array<i32>} : memref<8x128xf32, #tpu.memory_space<vmem>>, vector<8x128xf32>,
    return
  }
}

</mosaic_0001>

<llo_original>
// kernel: tpu_custom_call.1
$region0: #{tpu_custom_call.1}
  #allocation0 [shape = 'u32[]', space=smem, size = 0x4, offset = 0x4, fixed_abs, tag = 'smem constant byte address 0x4 - core index']
  #allocation1 [shape = 'u32[72,128]{1,0:T(1,128)}', space=vmem, size = 0x9000, scoped, tag = 'internal scratch']
  %s0 = inlined_call_operand.hbm [shape: f32[8,128], index: 0, kind: input, shape index: {}, may-alias: {0,2}]
  %s1 = inlined_call_operand.hbm [shape: f32[24,128], index: 1, kind: output, shape index: {0}]
  %s2 = inlined_call_operand.hbm [shape: f32[8,128], index: 2, kind: output, shape index: {1}, may-alias: {0,2}]
  %3 = xla_tuple %s1, %s2
  %s4 = sld [smem:[#allocation0]]
  $region26: #{tpu_custom_call.1} parent=0
    _
  %s6 = ssub.s32 1, %s4
  %s7 = scalar_select 0, %s6, %s4
  $region1: #{tpu_custom_call.1} parent=0
    #allocation2 [shape = 'u8[4096]{0}', space=vmem, size = 0x1000, scoped, tag = 'input window, operand 0, single buffered']
    #allocation3 [shape = 's32[1]{0}', space=sflag, size = 0x4, scoped, tag = 'scoped memory for tpu_custom_call.1']
    #allocation4 [shape = 's32[1]{0}', space=sflag, size = 0x4, scoped, tag = 'scoped memory for tpu_custom_call.1']
    #allocation5 [shape = 'u8[12288]{0}', space=vmem, size = 0x3000, scoped, tag = 'output window, operand 0, single buffered']
    #allocation6 [shape = 'u8[4096]{0}', space=vmem, size = 0x1000, scoped, tag = 'output window, operand 1, single buffered']
    #allocation7 [shape = 's32[1]{0}', space=sflag, size = 0x4, scoped, tag = 'scoped memory for tpu_custom_call.1']
    %8 = vsyncpa [#allocation3], 0
    %9 = vsyncpa [#allocation4], 0
    %10 = vsyncpa [#allocation7], 0
    // Predicated region
    $region2: #{tpu_custom_call.1} parent=1 // pred_check
      _
    $region3: #{tpu_custom_call.1} parent=1 // pred_check_branch
      %12 = sbr.rel (0) target = $region5
    $region4: #{tpu_custom_call.1} parent=1 // pred_region
      %14 = vsyncadd [#allocation3], 0
      %s16 = sshll.u32 %s0, 4
      %s17 = int_to_ptr.hbm [resolvable:$true] %s16
      %s18 = sshll.u32 [#allocation2], 4
      %s19 = int_to_ptr.vmem [resolvable:$true] %s18
      %21 = dma.hbm_to_vmem [thread:$0]  %s17, 128, %s19, [#allocation3]
    $region5: #{tpu_custom_call.1} parent=1 // pred_fallthru
      _
    // Predicated region
    $region6: #{tpu_custom_call.1} parent=1 // pred_check
      _
    $region7: #{tpu_custom_call.1} parent=1 // pred_check_branch
      %23 = sbr.rel (0) target = $region9
    $region8: #{tpu_custom_call.1} parent=1 // pred_region
      %25 = dma.done [#allocation3], 128
    $region9: #{tpu_custom_call.1} parent=1 // pred_fallthru
      _
    %vm26 = vcmp.gt.f32.partialorder -70.0, -50.0
    %v27 = vsel %vm26, 1, 0
    %v28 = vcvt.s32.f32 %v27
    %v29 = vld [vmem:[#allocation2] sm:$0xff]
    %v30 = vsub.f32 -70.0, %v29
    %31 = vst [vmem:[#allocation5] sm:$0xff] %v28
    %32 = vst [vmem:[#allocation5 + $0x8] sm:$0xff] -70.0
    %33 = vst [vmem:[#allocation5 + $0x10] sm:$0xff] %v30
    %34 = vst [vmem:[#allocation6] sm:$0xff] -70.0
    // Predicated region
    $region10: #{tpu_custom_call.1} parent=1 // pred_check
      _
    $region11: #{tpu_custom_call.1} parent=1 // pred_check_branch
      %36 = sbr.rel (0) target = $region13
    $region12: #{tpu_custom_call.1} parent=1 // pred_region
      %38 = vsyncadd [#allocation4], 0
      %s39 = sshll.u32 [#allocation5], 4
      %s40 = int_to_ptr.vmem [resolvable:$true] %s39
      %s41 = sshll.u32 %s1, 4
      %s42 = int_to_ptr.hbm [resolvable:$true] %s41
      %47 = dma.vmem_to_hbm [thread:$0]  %s40, 384, %s42, [#allocation4], 128, 128, 8
    $region13: #{tpu_custom_call.1} parent=1 // pred_fallthru
      _
    // Predicated region
    $region14: #{tpu_custom_call.1} parent=1 // pred_check
      _
    $region15: #{tpu_custom_call.1} parent=1 // pred_check_branch
      %49 = sbr.rel (0) target = $region17
    $region16: #{tpu_custom_call.1} parent=1 // pred_region
      %51 = vsyncadd [#allocation7], 0
      %s53 = sshll.u32 [#allocation6], 4
      %s54 = int_to_ptr.vmem [resolvable:$true] %s53
      %s55 = sshll.u32 %s2, 4
      %s56 = int_to_ptr.hbm [resolvable:$true] %s55
      %58 = dma.vmem_to_hbm [thread:$0]  %s54, 128, %s56, [#allocation7]
    $region17: #{tpu_custom_call.1} parent=1 // pred_fallthru
      _
    // Predicated region
    $region18: #{tpu_custom_call.1} parent=1 // pred_check
      _
    $region19: #{tpu_custom_call.1} parent=1 // pred_check_branch
      %60 = sbr.rel (0) target = $region21
    $region20: #{tpu_custom_call.1} parent=1 // pred_region
      %62 = dma.done [#allocation4], 384
    $region21: #{tpu_custom_call.1} parent=1 // pred_fallthru
      _
    // Predicated region
    $region22: #{tpu_custom_call.1} parent=1 // pred_check
      _
    $region23: #{tpu_custom_call.1} parent=1 // pred_check_branch
      %64 = sbr.rel (0) target = $region25
    $region24: #{tpu_custom_call.1} parent=1 // pred_region
      %66 = dma.done [#allocation7], 128
    $region25: #{tpu_custom_call.1} parent=1 // pred_fallthru
      _
    %67 = vsyncpa [#allocation3], 1
    %68 = vsyncpa [#allocation4], 1
    %69 = vsyncpa [#allocation7], 1

</llo_original>
